<compile_context>
chip_gen: v6e
topology: v6e:2x2x1
jax: 0.10.0
libtpu: 0.0.40
codegen_flags: <defaults>
</compile_context>

<pallas_src>
import jax
import jax.numpy as jnp
from jax.experimental import pallas as pl
from jax.experimental.pallas import tpu as pltpu  # noqa: F401

N_IN = 3    # Linear in_features
N_OUT = 5   # Linear out_features


def linear_sub_kernel(x1_ref, wt_ref, b_ref, x2_ref, o_ref):
    # x1_ref: (N, 3); wt_ref: (3, 5) = W^T; b_ref: (1, 5); x2_ref: (N, 5);
    # o_ref: (N, 5).
    # K = 3 contraction unrolled on the VPU; bias folded into the acc init.
    x1 = x1_ref[...]
    acc = b_ref[...] - x2_ref[...]
    acc = acc + x1[:, 0:1] * wt_ref[0:1, :]
    acc = acc + x1[:, 1:2] * wt_ref[1:2, :]
    acc = acc + x1[:, 2:3] * wt_ref[2:3, :]
    o_ref[...] = acc


def prepare_params(w, b):
    """One-time parameter prep: W^T as (3, 5), bias as a (1, 5) row."""
    w_t = jnp.asarray(w, jnp.float32).T                     # (3, 5)
    b_row = jnp.asarray(b, jnp.float32).reshape(1, N_OUT)   # (1, 5)
    return w_t, b_row


@jax.jit
def model_forward(x1, x2, w_t, b_row):
    """v2 = (x1 @ W^T + b) - x2, fused in one Pallas TPU kernel."""
    n = x1.shape[0]
    return pl.pallas_call(
        linear_sub_kernel,
        out_shape=jax.ShapeDtypeStruct((n, N_OUT), jnp.float32),
        # Whole-array blocks (shapes are tiny); single kernel invocation.
        in_specs=[
            pl.BlockSpec((n, N_IN), lambda: (0, 0)),
            pl.BlockSpec((N_IN, N_OUT), lambda: (0, 0)),
            pl.BlockSpec((1, N_OUT), lambda: (0, 0)),
            pl.BlockSpec((n, N_OUT), lambda: (0, 0)),
        ],
        out_specs=pl.BlockSpec((n, N_OUT), lambda: (0, 0)),
    )(x1, w_t, b_row, x2)


if __name__ == "__main__":
    key = jax.random.PRNGKey(0)
    k1, k2, kw, kb = jax.random.split(key, 4)

    N = 10
    x1 = jax.random.normal(k1, (N, N_IN), dtype=jnp.float32)
    x2 = jax.random.normal(k2, (N, N_OUT), dtype=jnp.float32)

    # Deterministic parameter init mimicking torch.nn.Linear (uniform +/- 1/sqrt(in)).
    bound = 1.0 / (N_IN ** 0.5)
    w = jax.random.uniform(kw, (N_OUT, N_IN), minval=-bound, maxval=bound,
                           dtype=jnp.float32)
    b = jax.random.uniform(kb, (N_OUT,), minval=-bound, maxval=bound,
                           dtype=jnp.float32)

    # Hoisted, once-per-model parameter preparation.
    w_t, b_row = prepare_params(w, b)

    out = model_forward(x1, x2, w_t, b_row)
    jax.block_until_ready(out)

    # Reference check in plain JAX.
    ref = x1 @ w.T + b - x2
    assert out.shape == (N, N_OUT)
    assert jnp.allclose(out, ref, atol=1e-5, rtol=1e-5)

    print("KERNEL_OK")
</pallas_src>

<mosaic_0001>
module attributes {stable_mosaic.version = 11 : i64} {
  func.func @linear_sub_kernel(%arg0: memref<10x3xf32, #tpu.memory_space<vmem>>, %arg1: memref<3x5xf32, #tpu.memory_space<vmem>>, %arg2: memref<1x5xf32, #tpu.memory_space<vmem>>, %arg3: memref<10x5xf32, #tpu.memory_space<vmem>>, %arg4: memref<10x5xf32, #tpu.memory_space<vmem>>) attributes {dimension_semantics = [], scalar_prefetch = 0 : i64, scratch_operands = 0 : i64, tpu.core_type = #tpu.core_type<tc>} {
    %c0 = arith.constant 0 : index
    %c0_0 = arith.constant 0 : index
    %0 = vector.load %arg0[%c0, %c0_0] : memref<10x3xf32, #tpu.memory_space<vmem>>, vector<10x3xf32>
    %c0_1 = arith.constant 0 : index
    %c0_2 = arith.constant 0 : index
    %1 = vector.load %arg2[%c0_1, %c0_2] : memref<1x5xf32, #tpu.memory_space<vmem>>, vector<1x5xf32>
    %c0_3 = arith.constant 0 : index
    %c0_4 = arith.constant 0 : index
    %2 = vector.load %arg3[%c0_3, %c0_4] : memref<10x5xf32, #tpu.memory_space<vmem>>, vector<10x5xf32>
    %3 = vector.broadcast %1 : vector<1x5xf32> to vector<10x5xf32>
    %4 = arith.subf %3, %2 : vector<10x5xf32>
    %5 = vector.extract_strided_slice %0 {offsets = [0, 0], sizes = [10, 1], strides = [1, 1]} : vector<10x3xf32> to vector<10x1xf32>
    %c0_5 = arith.constant 0 : index
    %c0_6 = arith.constant 0 : index
    %6 = vector.load %arg1[%c0_5, %c0_6] : memref<3x5xf32, #tpu.memory_space<vmem>>, vector<1x5xf32>
    %7 = vector.broadcast %5 : vector<10x1xf32> to vector<10x5xf32>
    %8 = vector.broadcast %6 : vector<1x5xf32> to vector<10x5xf32>
    %9 = arith.mulf %7, %8 : vector<10x5xf32>
    %10 = arith.addf %4, %9 : vector<10x5xf32>
    %11 = vector.extract_strided_slice %0 {offsets = [0, 1], sizes = [10, 1], strides = [1, 1]} : vector<10x3xf32> to vector<10x1xf32>
    %c1 = arith.constant 1 : index
    %c0_7 = arith.constant 0 : index
    %12 = vector.load %arg1[%c1, %c0_7] : memref<3x5xf32, #tpu.memory_space<vmem>>, vector<1x5xf32>
    %13 = vector.broadcast %11 : vector<10x1xf32> to vector<10x5xf32>
    %14 = vector.broadcast %12 : vector<1x5xf32> to vector<10x5xf32>
    %15 = arith.mulf %13, %14 : vector<10x5xf32>
    %16 = arith.addf %10, %15 : vector<10x5xf32>
    %17 = vector.extract_strided_slice %0 {offsets = [0, 2], sizes = [10, 1], strides = [1, 1]} : vector<10x3xf32> to vector<10x1xf32>
    %c2 = arith.constant 2 : index
    %c0_8 = arith.constant 0 : index
    %18 = vector.load %arg1[%c2, %c0_8] : memref<3x5xf32, #tpu.memory_space<vmem>>, vector<1x5xf32>
    %19 = vector.broadcast %17 : vector<10x1xf32> to vector<10x5xf32>
    %20 = vector.broadcast %18 : vector<1x5xf32> to vector<10x5xf32>
    %21 = arith.mulf %19, %20 : vector<10x5xf32>
    %22 = arith.addf %16, %21 : vector<10x5xf32>
    %c0_9 = arith.constant 0 : index
    %c0_10 = arith.constant 0 : index
    %23 = vector.load %arg4[%c0_9, %c0_10] : memref<10x5xf32, #tpu.memory_space<vmem>>, vector<10x5xf32>
    tpu.vector_store %arg4[%c0_9, %c0_10], %22 {strides = array<i32>} : memref<10x5xf32, #tpu.memory_space<vmem>>, vector<10x5xf32>,
    return
  }
}

</mosaic_0001>

<llo_original>
// kernel: model_forward.1
$region0: #{model_forward.1}
  #allocation0 [shape = 'u32[]', space=smem, size = 0x4, offset = 0x4, fixed_abs, tag = 'smem constant byte address 0x4 - core index']
  #allocation1 [shape = 'u32[144,128]{1,0:T(1,128)}', space=vmem, size = 0x12000, scoped, tag = 'internal scratch']
  %s0 = inlined_call_operand.vmem [shape: f32[10,3], index: 0, kind: input, shape index: {}]
  %s1 = inlined_call_operand.vmem [shape: f32[3,5], index: 1, kind: input, shape index: {}]
  %s2 = inlined_call_operand.vmem [shape: f32[1,5], index: 2, kind: input, shape index: {}]
  %s3 = inlined_call_operand.vmem [shape: f32[10,5], index: 3, kind: input, shape index: {}]
  %s4 = inlined_call_operand.vmem [shape: f32[10,5], index: 4, kind: output, shape index: {}]
  %s5 = sld [smem:[#allocation0]]
  $region26: #{model_forward.1} parent=0
    _
  %s7 = ssub.s32 1, %s5
  %s8 = scalar_select 0, %s7, %s5
  // Predicated region
  $region2: #{model_forward.1} parent=0 // pred_check
    _
  $region3: #{model_forward.1} parent=0 // pred_check_branch
    %10 = sbr.rel (0) target = $region5
  $region4: #{model_forward.1} parent=0 // pred_region
    _
  $region5: #{model_forward.1} parent=0 // pred_fallthru
    _
  // Predicated region
  $region6: #{model_forward.1} parent=0 // pred_check
    _
  $region7: #{model_forward.1} parent=0 // pred_check_branch
    %12 = sbr.rel (0) target = $region9
  $region8: #{model_forward.1} parent=0 // pred_region
    _
  $region9: #{model_forward.1} parent=0 // pred_fallthru
    _
  // Predicated region
  $region10: #{model_forward.1} parent=0 // pred_check
    _
  $region11: #{model_forward.1} parent=0 // pred_check_branch
    %14 = sbr.rel (0) target = $region13
  $region12: #{model_forward.1} parent=0 // pred_region
    _
  $region13: #{model_forward.1} parent=0 // pred_fallthru
    _
  // Predicated region
  $region14: #{model_forward.1} parent=0 // pred_check
    _
  $region15: #{model_forward.1} parent=0 // pred_check_branch
    %16 = sbr.rel (0) target = $region17
  $region16: #{model_forward.1} parent=0 // pred_region
    _
  $region17: #{model_forward.1} parent=0 // pred_fallthru
    _
  %v17 = vld [vmem:[%s0] sm:$0xff]
  %v18 = vld [vmem:[%s0 + $0x8] sm:$0x3]
  %v19 = vld [vmem:[%s2] sm:$0x1]
  %v20 = vld [vmem:[%s3] sm:$0xff]
  %v21 = vld [vmem:[%s3 + $0x8] sm:$0x3]
  %v23 = vlaneseq
  %v24 = vshrl.u32 %v23, 7
  %v25 = vsub.s32 0, %v24
  %v26 = vrot.slane %v19, %v25
  %v28 = vsub.f32 %v26, %v20
  %v29 = vsub.f32 %v26, %v21
  %v30 = vld [vmem:[%s1] sm:$0x1]
  %32 = vset.pattern.permute.xlu0 0
  %33 = vperm.xlu0 %32, %v17
  %v34 = vpop.permute.xlu0 %33
  %37 = vset.pattern.permute.xlu0 0
  %38 = vperm.xlu0 %37, %v18
  %v39 = vpop.permute.xlu0 %38
  %v41 = vlaneseq
  %v42 = vshrl.u32 %v41, 7
  %v43 = vsub.s32 0, %v42
  %v44 = vrot.slane %v30, %v43
  %v45 = vmul.f32 %v34, %v44
  %v46 = vmul.f32 %v39, %v44
  %v47 = vadd.f32 %v28, %v45
  %v48 = vadd.f32 %v29, %v46
  %v49 = vld [vmem:[%s1 + $0x1] sm:$0x1]
  %50 = vset.pattern.permute.xlu0 1
  %51 = vperm.xlu0 %50, %v17
  %v52 = vpop.permute.xlu0 %51
  %54 = vset.pattern.permute.xlu0 1
  %55 = vperm.xlu0 %54, %v18
  %v56 = vpop.permute.xlu0 %55
  %v58 = vlaneseq
  %v59 = vshrl.u32 %v58, 7
  %v60 = vsub.s32 0, %v59
  %v61 = vrot.slane %v49, %v60
  %v62 = vmul.f32 %v52, %v61
  %v63 = vmul.f32 %v56, %v61
  %v64 = vadd.f32 %v47, %v62
  %v65 = vadd.f32 %v48, %v63
  %v66 = vld [vmem:[%s1 + $0x2] sm:$0x1]
  %67 = vset.pattern.permute.xlu0 2
  %68 = vperm.xlu0 %67, %v17
  %v69 = vpop.permute.xlu0 %68
  %71 = vset.pattern.permute.xlu0 2
  %72 = vperm.xlu0 %71, %v18
  %v73 = vpop.permute.xlu0 %72
  %v75 = vlaneseq
  %v76 = vshrl.u32 %v75, 7
  %v77 = vsub.s32 0, %v76
  %v78 = vrot.slane %v66, %v77
  %v79 = vmul.f32 %v69, %v78
  %v80 = vmul.f32 %v73, %v78
  %v81 = vadd.f32 %v64, %v79
  %v82 = vadd.f32 %v65, %v80
  %vm83 = vcmask 39936
  %84 = vst.msk [vmem:[%s4] sm:$0xff] %vm83, %v81
  %vm85 = vcmask 33792
  %86 = vst.msk [vmem:[%s4 + $0x8] sm:$0x3] %vm85, %v82
  // Predicated region
  $region18: #{model_forward.1} parent=0 // pred_check
    _
  $region19: #{model_forward.1} parent=0 // pred_check_branch
    %88 = sbr.rel (0) target = $region21
  $region20: #{model_forward.1} parent=0 // pred_region
    _
  $region21: #{model_forward.1} parent=0 // pred_fallthru
    _
  // Predicated region
  $region22: #{model_forward.1} parent=0 // pred_check
    _
  $region23: #{model_forward.1} parent=0 // pred_check_branch
    %90 = sbr.rel (0) target = $region25
  $region24: #{model_forward.1} parent=0 // pred_region
    _
  $region25: #{model_forward.1} parent=0 // pred_fallthru
    _

</llo_original>
